<compile_context>
chip_gen: v5e
topology: v5e:2x2
jax: 0.10.0
libtpu: 0.0.40
codegen_flags: <defaults>
</compile_context>

<pallas_src>
import functools

import jax
import jax.numpy as jnp
from jax.experimental import pallas as pl
from jax.experimental.pallas import tpu as pltpu

_LANE = 128
# Below this many elements a standalone pallas_call is pure dispatch overhead;
# let XLA fuse the add into neighbouring ops instead.
_PALLAS_MIN_ELEMENTS = 1 << 15
_TARGET_BLOCK_BYTES = 4 << 20    # ~4 MiB blocks: roofline plateau on v6e/v7x
_VMEM_LIMIT_CAP = 32 << 20       # <= scoped default on v6e/v7x, < physical on v5e/v7x


def make_positional_encoding(d_model: int, max_len: int = 5000,
                             dtype=jnp.float32) -> jnp.ndarray:
    """Deterministic buffer setup (plain JAX glue) -- mirrors the module __init__.
    Create the buffer directly in the dtype you will feed x in (avoids any
    per-call convert)."""
    position = jnp.arange(0, max_len, dtype=jnp.float32)[:, None]            # (max_len, 1)
    div_term = jnp.exp(
        jnp.arange(0, d_model, 2, dtype=jnp.float32)
        * (-jnp.log(jnp.float32(10000.0)) / d_model)
    )                                                                         # (ceil(d/2),)
    pe = jnp.zeros((max_len, d_model), dtype=jnp.float32)
    pe = pe.at[:, 0::2].set(jnp.sin(position * div_term))
    if d_model % 2 == 1:
        pe = pe.at[:, 1::2].set(jnp.cos(position * div_term[:-1]))
    else:
        pe = pe.at[:, 1::2].set(jnp.cos(position * div_term))
    return pe[None, :, :].astype(dtype)                                       # (1, max_len, d_model)


def _pe_add_kernel(x_ref, pe_ref, o_ref):
    # Elementwise hot path; explicit cast keeps mixed-precision accumulation exact
    # up to the output dtype.
    o_ref[...] = (x_ref[...] + pe_ref[...]).astype(o_ref.dtype)


def _sublane(itemsize: int) -> int:
    return {4: 8, 2: 16, 1: 32}.get(itemsize, 8)


def _choose_tile_rows(n_rows: int, width: int, itemsize: int, requested=None) -> int:
    """Pick a sublane-multiple row tile targeting ~4 MiB blocks, capped so the
    (x, pe, out) double-buffered budget stays under the explicit VMEM limit."""
    sub = _sublane(itemsize)
    row_bytes = max(1, width * itemsize)
    if requested is None:
        rows = (_TARGET_BLOCK_BYTES // row_bytes) // sub * sub
    else:
        # Round caller-supplied tile_rows down to the dtype sublane multiple.
        rows = (int(requested) // sub) * sub
    rows = max(sub, rows)
    # Keep 6 * block_bytes + headroom under the VMEM limit cap.
    max_rows = max(sub, ((_VMEM_LIMIT_CAP - (2 << 20)) // (6 * row_bytes)) // sub * sub)
    rows = min(rows, max_rows)
    # Full extent is always legal as a block dim (even if not a sublane multiple).
    return n_rows if rows >= n_rows else rows


def _pallas_broadcast_add(x3, pe3, tile_rows=None, in_place=False):
    """x3: (B, R, W); pe3: (1, >=R, >=W). Returns x3 + pe3[:, :R, :W]."""
    B, R, W = x3.shape
    itemsize = x3.dtype.itemsize
    sub = _sublane(itemsize)
    tile_rows = _choose_tile_rows(R, W, itemsize, tile_rows)

    # v7x has 2 TensorCores: make sure a B == 1 problem still produces >= 2 grid
    # tiles along a "parallel" axis so both cores get work.
    if B == 1 and tile_rows >= R and R > sub:
        half = -(-((R + 1) // 2) // sub) * sub
        if half < R:
            tile_rows = half

    # Batch is the fastest-varying grid axis: pe's block index (0, s, 0) is
    # constant across it, so Pallas skips re-fetching the pe tile.
    grid = (pl.cdiv(R, tile_rows), B)

    block_bytes = tile_rows * W * itemsize
    # x, pe, out each double-buffered + ~2 MiB headroom. Explicit limit so the
    # larger blocks are also legal on v5e's 16 MiB scoped-VMEM default; the cap
    # keeps it within v7x's 32 MiB default / 64 MiB physical.
    vmem_limit = min(max(6 * block_bytes + (2 << 20), 16 << 20), _VMEM_LIMIT_CAP)

    cost = pl.CostEstimate(
        flops=B * R * W,
        transcendentals=0,
        bytes_accessed=(2 * B + 1) * R * W * itemsize,
    )

    extra = {"input_output_aliases": {0: 0}} if in_place else {}
    return pl.pallas_call(
        _pe_add_kernel,
        out_shape=jax.ShapeDtypeStruct((B, R, W), x3.dtype),
        grid_spec=pltpu.PrefetchScalarGridSpec(
            num_scalar_prefetch=0,
            grid=grid,
            in_specs=[
                pl.BlockSpec((1, tile_rows, W), lambda s, b: (b, s, 0)),  # x tile
                pl.BlockSpec((1, tile_rows, W), lambda s, b: (0, s, 0)),  # pe tile (bcast over B)
            ],
            out_specs=pl.BlockSpec((1, tile_rows, W), lambda s, b: (b, s, 0)),
        ),
        compiler_params=pltpu.CompilerParams(
            dimension_semantics=("parallel", "parallel"),
            vmem_limit_bytes=vmem_limit,
        ),
        cost_estimate=cost,
        **extra,
    )(x3, pe3)


@functools.partial(jax.jit, static_argnames=("force_pallas", "tile_rows", "in_place"))
def _positional_encoding_forward_jit(x, pe, force_pallas, tile_rows, in_place):
    B, S, D = x.shape
    _, max_len, d_model = pe.shape

    # Tiny problems: a standalone kernel launch is pure overhead; let XLA fuse.
    if not force_pallas and (B * S * D) < _PALLAS_MIN_ELEMENTS:
        return x + pe[:, :S, :D]

    if D % _LANE == 0:
        # Lane-aligned features: window straight into the FULL pe buffer (a
        # last-dim block that is a multiple of 128 is legal even when D < d_model)
        # -> no per-call slice copy at all.
        return _pallas_broadcast_add(x, pe, tile_rows, in_place)

    if (S * D) % _LANE == 0:
        # Lane-dense path for ANY D that is not a multiple of 128 (64, 192, ...):
        # collapse (S, D) into rows of 128 lanes so every store is an unmasked
        # full-width vst.
        R = (S * D) // _LANE
        if d_model == D and (max_len * D) % _LANE == 0:
            pe3 = pe.reshape(1, (max_len * D) // _LANE, _LANE)   # contiguous, no copy of note
        else:
            pe3 = pe[:, :S, :D].reshape(1, R, _LANE)             # only when width must shrink
        x3 = x.reshape(B, R, _LANE)
        out3 = _pallas_broadcast_add(x3, pe3, tile_rows, in_place)
        return out3.reshape(B, S, D)

    # Fallback: full-width feature blocks (D equals x's full last-dim extent, so
    # the block is legal despite D % 128 != 0); slice pe only if it is wider.
    pe_w = pe if d_model == D else pe[:, :S, :D]
    return _pallas_broadcast_add(x, pe_w, tile_rows, in_place)


def positional_encoding_forward(x, pe, *, force_pallas=False, tile_rows=None,
                                in_place=False):
    """x: (B, S, D); pe: (1, max_len, d_model). Returns x + pe[:, :S, :D]."""
    B, S, D = x.shape
    _, max_len, d_model = pe.shape
    if S > max_len or D > d_model:
        raise ValueError(
            f"input (S={S}, D={D}) exceeds positional-encoding buffer "
            f"(max_len={max_len}, d_model={d_model})")

    if pe.dtype != x.dtype:
        # Fallback only: this convert is a full-buffer HBM pass. Prefer creating
        # the buffer in x.dtype (make_positional_encoding(dtype=...)) or use the
        # PositionalEncoding class below, which caches one copy per dtype.
        # Note: casting pe to a narrower dtype before the add double-rounds vs
        # an f32-pe reference; the error is tiny (|pe| <= 1).
        pe = pe.astype(x.dtype)

    return _positional_encoding_forward_jit(
        x, pe, force_pallas=force_pallas, tile_rows=tile_rows, in_place=in_place)


class PositionalEncoding:
    """Module-like wrapper: builds the pe buffer once and caches per-dtype copies
    so the forward path never emits a per-call convert."""

    def __init__(self, d_model: int, max_len: int = 5000, dtype=jnp.float32):
        self.d_model = d_model
        self.max_len = max_len
        base = make_positional_encoding(d_model, max_len, dtype)
        self._pe_by_dtype = {jnp.dtype(dtype): base}

    def pe(self, dtype):
        key = jnp.dtype(dtype)
        buf = self._pe_by_dtype.get(key)
        if buf is None:
            buf = next(iter(self._pe_by_dtype.values())).astype(key)  # one-time cast
            self._pe_by_dtype[key] = buf
        return buf

    def __call__(self, x, **kwargs):
        return positional_encoding_forward(x, self.pe(x.dtype), **kwargs)


if __name__ == "__main__":
    key = jax.random.PRNGKey(0)
    k1, k2, k3, k4 = jax.random.split(key, 4)

    # Test 1: tiny shape from the module spec (batch=2, seq=8, d_model=32).
    # Force the Pallas path so the kernel itself is exercised (lane-dense flatten).
    B, S, D, MAX_LEN = 2, 8, 32, 50
    module = PositionalEncoding(D, MAX_LEN)
    x = jax.random.normal(k1, (B, S, D), dtype=jnp.float32)
    out = jax.block_until_ready(module(x, force_pallas=True))
    ref = x + module.pe(x.dtype)[:, :S, :D]
    assert out.shape == (B, S, D)
    assert jnp.allclose(out, ref, atol=1e-6), "mismatch vs reference (test 1)"

    # Test 2: lane-dense flattened path (D % 128 != 0) with multiple sequence tiles
    # and an explicit (non-sublane-checked) tile_rows from the caller.
    B, S, D, MAX_LEN = 2, 1024, 64, 2048
    pe = make_positional_encoding(D, MAX_LEN)
    x = jax.random.normal(k2, (B, S, D), dtype=jnp.float32)
    out = jax.block_until_ready(positional_encoding_forward(x, pe, tile_rows=128))
    ref = x + pe[:, :S, :D]
    assert jnp.allclose(out, ref, atol=1e-6), "mismatch vs reference (test 2)"

    # Test 3: standard (B, S, D) path with D a multiple of 128 and sequence tiling.
    B, S, D, MAX_LEN = 2, 256, 128, 512
    pe = make_positional_encoding(D, MAX_LEN)
    x = jax.random.normal(k3, (B, S, D), dtype=jnp.float32)
    out = jax.block_until_ready(positional_encoding_forward(x, pe, tile_rows=64))
    ref = x + pe[:, :S, :D]
    assert jnp.allclose(out, ref, atol=1e-6), "mismatch vs reference (test 3)"

    # Test 4: D < d_model with D % 128 == 0 — windows directly into the wider pe
    # buffer with no slice copy.
    B, S, D, MAX_LEN, D_MODEL = 2, 64, 128, 128, 256
    pe = make_positional_encoding(D_MODEL, MAX_LEN)
    x = jax.random.normal(k4, (B, S, D), dtype=jnp.float32)
    out = jax.block_until_ready(positional_encoding_forward(x, pe, force_pallas=True))
    ref = x + pe[:, :S, :D]
    assert jnp.allclose(out, ref, atol=1e-6), "mismatch vs reference (test 4)"

    print("KERNEL_OK")
</pallas_src>

<mosaic_0001>
module attributes {stable_mosaic.version = 11 : i64} {
  func.func @_pe_add_kernel(%arg0: i32, %arg1: i32, %arg2: memref<1x2x128xf32, #tpu.memory_space<vmem>>, %arg3: memref<1x2x128xf32, #tpu.memory_space<vmem>>, %arg4: memref<1x2x128xf32, #tpu.memory_space<vmem>>) attributes {dimension_semantics = [#tpu.dimension_semantics<parallel>, #tpu.dimension_semantics<parallel>], iteration_bounds = array<i64: 1, 2>, scalar_prefetch = 0 : i64, scratch_operands = 0 : i64, tpu.core_type = #tpu.core_type<tc>, window_params = [{transform_indices = @transform_0, window_bounds = array<i64: 1, 2, 128>}, {transform_indices = @transform_1, window_bounds = array<i64: 1, 2, 128>}, {transform_indices = @transform_2, window_bounds = array<i64: 1, 2, 128>}]} {
    %c0 = arith.constant 0 : index
    %c0_0 = arith.constant 0 : index
    %c0_1 = arith.constant 0 : index
    %0 = vector.load %arg2[%c0, %c0_0, %c0_1] : memref<1x2x128xf32, #tpu.memory_space<vmem>>, vector<1x2x128xf32>
    %c0_2 = arith.constant 0 : index
    %c0_3 = arith.constant 0 : index
    %c0_4 = arith.constant 0 : index
    %1 = vector.load %arg3[%c0_2, %c0_3, %c0_4] : memref<1x2x128xf32, #tpu.memory_space<vmem>>, vector<1x2x128xf32>
    %2 = arith.addf %0, %1 : vector<1x2x128xf32>
    %c0_5 = arith.constant 0 : index
    %c0_6 = arith.constant 0 : index
    %c0_7 = arith.constant 0 : index
    %3 = vector.load %arg4[%c0_5, %c0_6, %c0_7] : memref<1x2x128xf32, #tpu.memory_space<vmem>>, vector<1x2x128xf32>
    tpu.vector_store %arg4[%c0_5, %c0_6, %c0_7], %2 {strides = array<i32>} : memref<1x2x128xf32, #tpu.memory_space<vmem>>, vector<1x2x128xf32>,
    return
  }
  func.func @transform_0(%arg0: i32, %arg1: i32) -> (i32, i32, i32) {
    %c0_i32 = arith.constant 0 : i32
    %c0_i32_0 = arith.constant 0 : i32
    return %arg1, %arg0, %c0_i32 : i32, i32, i32
  }
  func.func @transform_1(%arg0: i32, %arg1: i32) -> (i32, i32, i32) {
    %c0_i32 = arith.constant 0 : i32
    %c0_i32_0 = arith.constant 0 : i32
    %c0_i32_1 = arith.constant 0 : i32
    return %c0_i32, %arg0, %c0_i32_0 : i32, i32, i32
  }
  func.func @transform_2(%arg0: i32, %arg1: i32) -> (i32, i32, i32) {
    %c0_i32 = arith.constant 0 : i32
    %c0_i32_0 = arith.constant 0 : i32
    return %arg1, %arg0, %c0_i32 : i32, i32, i32
  }
}

</mosaic_0001>

<llo_original>
// kernel: _positional_encoding_forward_jit.1
$region0: #{_positional_encoding_forward_jit.1}
  #allocation0 [shape = 'u32[]', space=smem, size = 0x4, offset = 0x4, fixed_abs, tag = 'smem constant byte address 0x4 - core index']
  #allocation1 [shape = 'u32[72,128]{1,0:T(1,128)}', space=vmem, size = 0x9000, scoped, tag = 'internal scratch']
  %s0 = inlined_call_operand.vmem [shape: f32[2,2,128], index: 0, kind: input, shape index: {}]
  %s1 = inlined_call_operand.vmem [shape: f32[1,2,128], index: 1, kind: input, shape index: {}]
  %s2 = inlined_call_operand.vmem [shape: f32[2,2,128], index: 2, kind: output, shape index: {}]
  %s3 = sld [smem:[#allocation0]]
  $region41: #{_positional_encoding_forward_jit.1} parent=0
    _
  %s5 = ssub.s32 1, %s3
  %s6 = scalar_select 0, %s5, %s3
  loop: start=0, step=1, limit=4
  $region2: #{_positional_encoding_forward_jit.1} parent=0 // loop_pre_header
    _
  $region3: #{_positional_encoding_forward_jit.1} parent=0 // loop_header
    %s8 = sphi 0, %s12
    %p9 = scmp.ge.s32.totalorder %s8, 4
    %s15 = sphi 0, %s27
    %s16 = sphi 0, %s23
    %s17 = sphi 0, %s15
    %s18 = sphi 0, %s16
    %s19 = sphi 0, %s17
    %s20 = sphi 0, %s18
    %s32 = sphi 0, %s34
    %s35 = sphi 0, %s32
    %s36 = sphi 0, %s35
    %s52 = sphi 0, %s36
    %s58 = sphi 0, %s60
    %s61 = sphi 0, %s58
    %s62 = sphi 0, %s61
    %s78 = sphi 0, %s62
    %s86 = sphi 0, %s88
    %s89 = sphi 0, %s86
    %s90 = sphi 0, %s89
    %s106 = sphi 0, %s90
  $region4: #{_positional_encoding_forward_jit.1} parent=0 // loop_header_branch
    %11 = sbr.rel (%p9) target = $region8
  $region5: #{_positional_encoding_forward_jit.1} parent=0 // loop_body
    %s13 = ssub.s32 %s8, 1
    %s14 = ssub.s32 %s8, 2
    %s21 = sadd.s32 1, %s16
    %p22 = scmp.ge.s32.totalorder %s21, 2
    %s23 = scalar_select %p22, 0, %s21
    %s24 = sadd.s32 1, %s15
    %s25 = scalar_select %p22, %s24, %s15
    %p26 = scmp.ge.s32.totalorder %s25, 1
    %s27 = scalar_select %p26, 0, %s25
    %s28 = ssub.s32 %s16, %s23
    %s29 = ssub.s32 %s15, %s27
    %s30 = sor.u32 %s28, %s29
    %p31 = scmp.eq.s32.totalorder %s30, 0
    %s33 = sadd.s32 %s32, 1
    %s34 = scalar_select %p31, %s32, %s33
    %p37 = pneg %p31
    %p38 = scmp.eq.s32.totalorder %s8, 1
    %p39 = por %p37, %p38
    %p40 = scmp.ne.s32.totalorder %s32, %s35
    %p41 = scmp.eq.s32.totalorder %s8, 0
    %p42 = por %p40, %p41
    %p43 = scmp.ne.s32.totalorder %s32, %s35
    %p44 = scmp.eq.s32.totalorder %s13, 1
    %p45 = por %p43, %p44
    %p46 = scmp.ne.s32.totalorder %s35, %s36
    %p47 = scmp.eq.s32.totalorder %s13, 0
    %p48 = por %p46, %p47
    %p49 = scmp.ne.s32.totalorder %s35, %s36
    %p50 = scmp.eq.s32.totalorder %s14, 1
    %p51 = por %p49, %p50
    %p53 = scmp.ne.s32.totalorder %s36, %s52
    %p54 = scmp.eq.s32.totalorder %s14, 0
    %p55 = por %p53, %p54
    %s56 = ssub.s32 %s15, %s27
    %p57 = scmp.eq.s32.totalorder %s56, 0
    %s59 = sadd.s32 %s58, 1
    %s60 = scalar_select %p57, %s58, %s59
    %p63 = pneg %p57
    %p64 = scmp.eq.s32.totalorder %s8, 1
    %p65 = por %p63, %p64
    %p66 = scmp.ne.s32.totalorder %s58, %s61
    %p67 = scmp.eq.s32.totalorder %s8, 0
    %p68 = por %p66, %p67
    %p69 = scmp.ne.s32.totalorder %s58, %s61
    %p70 = scmp.eq.s32.totalorder %s13, 1
    %p71 = por %p69, %p70
    %p72 = scmp.ne.s32.totalorder %s61, %s62
    %p73 = scmp.eq.s32.totalorder %s13, 0
    %p74 = por %p72, %p73
    %p75 = scmp.ne.s32.totalorder %s61, %s62
    %p76 = scmp.eq.s32.totalorder %s14, 1
    %p77 = por %p75, %p76
    %p79 = scmp.ne.s32.totalorder %s62, %s78
    %p80 = scmp.eq.s32.totalorder %s14, 0
    %p81 = por %p79, %p80
    %s82 = ssub.s32 %s16, %s23
    %s83 = ssub.s32 %s15, %s27
    %s84 = sor.u32 %s82, %s83
    %p85 = scmp.eq.s32.totalorder %s84, 0
    %s87 = sadd.s32 %s86, 1
    %s88 = scalar_select %p85, %s86, %s87
    %p91 = pneg %p85
    %p92 = scmp.eq.s32.totalorder %s8, 1
    %p93 = por %p91, %p92
    %p94 = scmp.ne.s32.totalorder %s86, %s89
    %p95 = scmp.eq.s32.totalorder %s8, 0
    %p96 = por %p94, %p95
    %p97 = scmp.ne.s32.totalorder %s86, %s89
    %p98 = scmp.eq.s32.totalorder %s13, 1
    %p99 = por %p97, %p98
    %p100 = scmp.ne.s32.totalorder %s89, %s90
    %p101 = scmp.eq.s32.totalorder %s13, 0
    %p102 = por %p100, %p101
    %p103 = scmp.ne.s32.totalorder %s89, %s90
    %p104 = scmp.eq.s32.totalorder %s14, 1
    %p105 = por %p103, %p104
    %p107 = scmp.ne.s32.totalorder %s90, %s106
    %p108 = scmp.eq.s32.totalorder %s14, 0
    %p109 = por %p107, %p108
    %p110 = scmp.le.s32.totalorder 1, %s8
    %p111 = scmp.lt.s32.totalorder %s8, 3
    %p112 = pnand %p110, %p111
    %p113 = pneg %p112
    // Predicated region
    $region9: #{_positional_encoding_forward_jit.1} parent=5 // pred_check
      _
    $region10: #{_positional_encoding_forward_jit.1} parent=5 // pred_check_branch
      %115 = sbr.rel (%p112) target = $region12
    $region11: #{_positional_encoding_forward_jit.1} parent=5 // pred_region
      %s116 = ssub.s32 %s8, 1
      // Predicated region
      $region13: #{_positional_encoding_forward_jit.1} parent=11 // pred_check
        %p117 = pneg %p74
      $region14: #{_positional_encoding_forward_jit.1} parent=11 // pred_check_branch
        %119 = sbr.rel (%p117) target = $region16
      $region15: #{_positional_encoding_forward_jit.1} parent=11 // pred_region
        %p120 = scmp.lt.s32.totalorder %s17, 0
        %s121 = scalar_select %p120, %s17, 0
        %s122 = smul.addr %s121, 2
        %s123 = scalar_lea.vmem %s1, %s122
      $region16: #{_positional_encoding_forward_jit.1} parent=11 // pred_fallthru
        _
    $region12: #{_positional_encoding_forward_jit.1} parent=5 // pred_fallthru
      _
    %p124 = scmp.lt.s32.totalorder %s8, 2
    // Predicated region
    $region17: #{_positional_encoding_forward_jit.1} parent=5 // pred_check
      %p125 = pneg %p124
    $region18: #{_positional_encoding_forward_jit.1} parent=5 // pred_check_branch
      %127 = sbr.rel (%p125) target = $region20
    $region19: #{_positional_encoding_forward_jit.1} parent=5 // pred_region
      // Predicated region
      $region21: #{_positional_encoding_forward_jit.1} parent=19 // pred_check
        %p128 = pneg %p42
      $region22: #{_positional_encoding_forward_jit.1} parent=19 // pred_check_branch
        %130 = sbr.rel (%p128) target = $region24
      $region23: #{_positional_encoding_forward_jit.1} parent=19 // pred_region
        %p131 = scmp.lt.s32.totalorder %s16, 1
        %s132 = scalar_select %p131, %s16, 1
        %p133 = scmp.lt.s32.totalorder %s15, 0
        %s134 = scalar_select %p133, %s15, 0
        %s135 = sadd.s32 %s134, %s132
        %s136 = smul.addr %s135, 2
        %s137 = scalar_lea.vmem %s0, %s136
      $region24: #{_positional_encoding_forward_jit.1} parent=19 // pred_fallthru
        _
    $region20: #{_positional_encoding_forward_jit.1} parent=5 // pred_fallthru
      _
    %p138 = scmp.le.s32.totalorder 1, %s8
    %p139 = scmp.lt.s32.totalorder %s8, 3
    %p140 = pnand %p138, %p139
    %p141 = pneg %p140
    // Predicated region
    $region25: #{_positional_encoding_forward_jit.1} parent=5 // pred_check
      _
    $region26: #{_positional_encoding_forward_jit.1} parent=5 // pred_check_branch
      %143 = sbr.rel (%p140) target = $region28
    $region27: #{_positional_encoding_forward_jit.1} parent=5 // pred_region
      %s144 = ssub.s32 %s8, 1
      %p145 = scmp.lt.s32.totalorder %s18, 1
      %s146 = scalar_select %p145, %s18, 1
      %p147 = scmp.lt.s32.totalorder %s17, 0
      %s148 = scalar_select %p147, %s17, 0
      %s149 = sadd.s32 %s148, %s146
      %s150 = smul.addr %s149, 2
      %s151 = scalar_lea.vmem %s0, %s150
      %p152 = pneg %p48
      %p153 = pneg %p45
      %p154 = scmp.lt.s32.totalorder %s17, 0
      %s155 = scalar_select %p154, %s17, 0
      %s156 = smul.addr %s155, 2
      %s157 = scalar_lea.vmem %s1, %s156
      %p158 = pneg %p74
      %p159 = pneg %p71
      %p160 = pneg %p102
      %p161 = pneg %p99
      %p162 = scmp.lt.s32.totalorder %s18, 1
      %s163 = scalar_select %p162, %s18, 1
      %p164 = scmp.lt.s32.totalorder %s17, 0
      %s165 = scalar_select %p164, %s17, 0
      %s166 = sadd.s32 %s165, %s163
      %s167 = smul.addr %s166, 2
      %s168 = scalar_lea.vmem %s2, %s167
      %p169 = scmp.lt.s32.totalorder %s18, 1
      %s170 = scalar_select %p169, %s18, 1
      %p171 = scmp.lt.s32.totalorder %s17, 0
      %s172 = scalar_select %p171, %s17, 0
      %s173 = sadd.s32 %s172, %s170
      %s174 = smul.addr %s173, 2
      %s175 = scalar_lea.vmem %s0, %s174
      %p176 = scmp.lt.s32.totalorder %s17, 0
      %s177 = scalar_select %p176, %s17, 0
      %s178 = smul.addr %s177, 2
      %s179 = scalar_lea.vmem %s1, %s178
      %p180 = scmp.lt.s32.totalorder %s18, 1
      %s181 = scalar_select %p180, %s18, 1
      %p182 = scmp.lt.s32.totalorder %s17, 0
      %s183 = scalar_select %p182, %s17, 0
      %s184 = sadd.s32 %s183, %s181
      %s185 = smul.addr %s184, 2
      %s186 = scalar_lea.vmem %s2, %s185
      %v187 = vld [vmem:[%s175] sm:$0x3]
      %v188 = vld [vmem:[%s179] sm:$0x3]
      %v189 = vadd.f32 %v187, %v188
      %190 = vst [vmem:[%s186] sm:$0x3] %v189
      %p191 = scmp.lt.s32.totalorder %s18, 1
      %s192 = scalar_select %p191, %s18, 1
      %p193 = scmp.lt.s32.totalorder %s17, 0
      %s194 = scalar_select %p193, %s17, 0
      %s195 = sadd.s32 %s194, %s192
      %s196 = smul.addr %s195, 2
      %s197 = scalar_lea.vmem %s2, %s196
      // Predicated region
      $region29: #{_positional_encoding_forward_jit.1} parent=27 // pred_check
        %p198 = pneg %p99
      $region30: #{_positional_encoding_forward_jit.1} parent=27 // pred_check_branch
        %200 = sbr.rel (%p198) target = $region32
      $region31: #{_positional_encoding_forward_jit.1} parent=27 // pred_region
        _
      $region32: #{_positional_encoding_forward_jit.1} parent=27 // pred_fallthru
        _
    $region28: #{_positional_encoding_forward_jit.1} parent=5 // pred_fallthru
      _
    %p201 = scmp.le.s32.totalorder 2, %s8
    // Predicated region
    $region33: #{_positional_encoding_forward_jit.1} parent=5 // pred_check
      %p202 = pneg %p201
    $region34: #{_positional_encoding_forward_jit.1} parent=5 // pred_check_branch
      %204 = sbr.rel (%p202) target = $region36
    $region35: #{_positional_encoding_forward_jit.1} parent=5 // pred_region
      %s205 = ssub.s32 %s8, 2
      // Predicated region
      $region37: #{_positional_encoding_forward_jit.1} parent=35 // pred_check
        %p206 = pneg %p105
      $region38: #{_positional_encoding_forward_jit.1} parent=35 // pred_check_branch
        %208 = sbr.rel (%p206) target = $region40
      $region39: #{_positional_encoding_forward_jit.1} parent=35 // pred_region
        %p209 = scmp.lt.s32.totalorder %s20, 1
        %s210 = scalar_select %p209, %s20, 1
        %p211 = scmp.lt.s32.totalorder %s19, 0
        %s212 = scalar_select %p211, %s19, 0
        %s213 = sadd.s32 %s212, %s210
        %s214 = smul.addr %s213, 2
        %s215 = scalar_lea.vmem %s2, %s214
      $region40: #{_positional_encoding_forward_jit.1} parent=35 // pred_fallthru
        _
    $region36: #{_positional_encoding_forward_jit.1} parent=5 // pred_fallthru
      _
  $region6: #{_positional_encoding_forward_jit.1} parent=0 // loop_footer
    %s12 = sadd.s32 1, %s8
  $region7: #{_positional_encoding_forward_jit.1} parent=0 // loop_footer_branch
    %7 = sbr.rel target = $region3
  $region8: #{_positional_encoding_forward_jit.1} parent=0 // loop_exit
    _

</llo_original>
